<compile_context>
chip_gen: v5e
topology: v5e:2x2
jax: 0.10.0
libtpu: 0.0.40
codegen_flags: <defaults>
</compile_context>

<pallas_src>
import jax
import jax.numpy as jnp
from jax import lax
from jax.experimental import pallas as pl
from jax.experimental.pallas import tpu as pltpu


_EPS = 1e-8
_TARGET_BLOCK_BYTES = 4 * 1024 * 1024      # ~4 MiB/block -> <=16 MiB pipelined
_VMEM_LIMIT_BYTES = 32 * 1024 * 1024       # safe on v5e/v6e/v7x


def _pixelnorm_kernel_axis1(x_ref, o_ref):
    """Block (BT, C, TILE_HW): normalize each pixel's channel vector (axis 1)."""
    x = x_ref[...]
    xf = x.astype(jnp.float32)
    mean_sq = jnp.mean(xf * xf, axis=1, keepdims=True)         # (BT, 1, TILE_HW)
    inv = lax.rsqrt(mean_sq + _EPS).astype(x.dtype)
    o_ref[...] = x * inv


def _pixelnorm_kernel_lastaxis(x_ref, o_ref):
    """Block (TILE_M, C), channels-last: normalize along the lane (last) axis."""
    x = x_ref[...]
    xf = x.astype(jnp.float32)
    mean_sq = jnp.mean(xf * xf, axis=-1, keepdims=True)        # (TILE_M, 1)
    inv = lax.rsqrt(mean_sq + _EPS).astype(x.dtype)
    o_ref[...] = x * inv


def _largest_divisor_multiple(total, base, cap):
    """Largest d <= cap with d % base == 0 and total % d == 0 (or None)."""
    best = None
    d = base
    cap = min(cap, total)
    while d <= cap:
        if total % d == 0:
            best = d
        d += base
    return best


def _pixel_norm_nchw_flat(x3, N, C, HW, itemsize):
    """x3: (N, C, HW) with HW >= 128. Lane-dense spatial tiling."""
    # Spatial tile: multiple of 128 (lane-dense, unmasked stores), capped by
    # the per-block byte budget.
    cap_hw = max(128, _TARGET_BLOCK_BYTES // max(C * itemsize, 1))
    tile_hw = _largest_divisor_multiple(HW, 128, cap_hw)
    if tile_hw is None:
        if C * HW * itemsize <= 2 * _TARGET_BLOCK_BYTES:
            tile_hw = HW                       # full extent: always legal
        else:
            # No 128-multiple divisor: tile anyway, Pallas masks the ragged tail
            # (reduce is over C only, so padded columns never mix with real data).
            tile_hw = max(128, (min(cap_hw, HW) // 128) * 128)
    n_spatial = pl.cdiv(HW, tile_hw)

    # Pack several batch elements per block while staying under the budget.
    per_batch = C * tile_hw * itemsize
    bt = max(1, min(N, _TARGET_BLOCK_BYTES // max(per_batch, 1)))
    while N % bt:
        bt -= 1
    grid = (N // bt, n_spatial)

    return pl.pallas_call(
        _pixelnorm_kernel_axis1,
        out_shape=jax.ShapeDtypeStruct((N, C, HW), x3.dtype),
        grid_spec=pltpu.PrefetchScalarGridSpec(
            num_scalar_prefetch=0,
            grid=grid,
            in_specs=[pl.BlockSpec((bt, C, tile_hw), lambda b, s: (b, 0, s))],
            out_specs=pl.BlockSpec((bt, C, tile_hw), lambda b, s: (b, 0, s)),
        ),
        compiler_params=pltpu.CompilerParams(
            dimension_semantics=("parallel", "parallel"),
            vmem_limit_bytes=_VMEM_LIMIT_BYTES,
        ),
    )(x3)


def _pixel_norm_channels_last(x2, M, C, itemsize):
    """x2: (M, C) = (N*H*W, C). Channels on lanes, reduce over last axis."""
    cap_m = max(8, _TARGET_BLOCK_BYTES // max(C * itemsize, 1))
    tm = _largest_divisor_multiple(M, 8, cap_m)
    if tm is None:
        tm = M                                  # full extent: always legal
    grid = (M // tm,)

    return pl.pallas_call(
        _pixelnorm_kernel_lastaxis,
        out_shape=jax.ShapeDtypeStruct((M, C), x2.dtype),
        grid_spec=pltpu.PrefetchScalarGridSpec(
            num_scalar_prefetch=0,
            grid=grid,
            in_specs=[pl.BlockSpec((tm, C), lambda i: (i, 0))],
            out_specs=pl.BlockSpec((tm, C), lambda i: (i, 0)),
        ),
        compiler_params=pltpu.CompilerParams(
            dimension_semantics=("parallel",),
            vmem_limit_bytes=_VMEM_LIMIT_BYTES,
        ),
    )(x2)


def pixel_norm(x):
    """PixelNorm forward: x (N, C, H, W) -> x * rsqrt(mean(x^2, dim=1) + 1e-8)."""
    N, C, H, W = x.shape
    HW = H * W
    itemsize = jnp.dtype(x.dtype).itemsize

    if HW >= 128:
        # Lane-dense NCHW path: lanes carry a 128-multiple tile of H*W.
        out = _pixel_norm_nchw_flat(x.reshape(N, C, HW), N, C, HW, itemsize)
        return out.reshape(N, C, H, W)
    else:
        # Tiny spatial extent (e.g. 512x4x4): channels-last so C sits on lanes.
        x2 = jnp.transpose(x, (0, 2, 3, 1)).reshape(N * HW, C)
        out = _pixel_norm_channels_last(x2, N * HW, C, itemsize)
        return jnp.transpose(out.reshape(N, H, W, C), (0, 3, 1, 2))


def pixel_norm_ref(x):
    xf = x.astype(jnp.float32)
    return (xf * lax.rsqrt(jnp.mean(xf * xf, axis=1, keepdims=True) + _EPS)
            ).astype(x.dtype)


if __name__ == "__main__":
    key = jax.random.PRNGKey(0)
    x = jax.random.normal(key, (2, 4, 16, 16), dtype=jnp.float32)

    out = jax.block_until_ready(pixel_norm(x))
    assert out.shape == x.shape and out.dtype == x.dtype
    assert jnp.allclose(out, pixel_norm_ref(x), atol=1e-5, rtol=1e-5)

    # Also exercise the channels-last path (large C, tiny spatial).
    x2 = jax.random.normal(jax.random.PRNGKey(1), (2, 32, 4, 4), dtype=jnp.float32)
    out2 = jax.block_until_ready(pixel_norm(x2))
    assert jnp.allclose(out2, pixel_norm_ref(x2), atol=1e-5, rtol=1e-5)

    print("KERNEL_OK")
</pallas_src>

<mosaic_0001>
module attributes {stable_mosaic.version = 11 : i64} {
  func.func @_pixelnorm_kernel_axis1(%arg0: i32, %arg1: i32, %arg2: memref<2x4x256xf32, #tpu.memory_space<vmem>>, %arg3: memref<2x4x256xf32, #tpu.memory_space<vmem>>) attributes {dimension_semantics = [#tpu.dimension_semantics<parallel>, #tpu.dimension_semantics<parallel>], iteration_bounds = array<i64: 1, 1>, scalar_prefetch = 0 : i64, scratch_operands = 0 : i64, tpu.core_type = #tpu.core_type<tc>, window_params = [{transform_indices = @transform_0, window_bounds = array<i64: 2, 4, 256>}, {transform_indices = @transform_1, window_bounds = array<i64: 2, 4, 256>}]} {
    %c0 = arith.constant 0 : index
    %c0_0 = arith.constant 0 : index
    %c0_1 = arith.constant 0 : index
    %0 = vector.load %arg2[%c0, %c0_0, %c0_1] : memref<2x4x256xf32, #tpu.memory_space<vmem>>, vector<2x4x256xf32>
    %1 = arith.mulf %0, %0 : vector<2x4x256xf32>
    %cst = arith.constant dense<0.000000e+00> : vector<2x256xf32>
    %2 = vector.multi_reduction <add>, %1, %cst [1] : vector<2x4x256xf32> to vector<2x256xf32>
    %3 = vector.shape_cast %2 : vector<2x256xf32> to vector<2x1x256xf32>
    %cst_2 = arith.constant 4.000000e+00 : f32
    %4 = vector.broadcast %cst_2 : f32 to vector<2x1x256xf32>
    %5 = arith.divf %3, %4 : vector<2x1x256xf32>
    %cst_3 = arith.constant 9.99999993E-9 : f32
    %6 = vector.broadcast %cst_3 : f32 to vector<2x1x256xf32>
    %7 = arith.addf %5, %6 : vector<2x1x256xf32>
    %8 = math.rsqrt %7 : vector<2x1x256xf32>
    %9 = vector.broadcast %8 : vector<2x1x256xf32> to vector<2x4x256xf32>
    %10 = arith.mulf %0, %9 : vector<2x4x256xf32>
    %c0_4 = arith.constant 0 : index
    %c0_5 = arith.constant 0 : index
    %c0_6 = arith.constant 0 : index
    %11 = vector.load %arg3[%c0_4, %c0_5, %c0_6] : memref<2x4x256xf32, #tpu.memory_space<vmem>>, vector<2x4x256xf32>
    tpu.vector_store %arg3[%c0_4, %c0_5, %c0_6], %10 {strides = array<i32>} : memref<2x4x256xf32, #tpu.memory_space<vmem>>, vector<2x4x256xf32>,
    return
  }
  func.func @transform_0(%arg0: i32, %arg1: i32) -> (i32, i32, i32) {
    %c0_i32 = arith.constant 0 : i32
    %c0_i32_0 = arith.constant 0 : i32
    return %arg0, %c0_i32, %arg1 : i32, i32, i32
  }
  func.func @transform_1(%arg0: i32, %arg1: i32) -> (i32, i32, i32) {
    %c0_i32 = arith.constant 0 : i32
    %c0_i32_0 = arith.constant 0 : i32
    return %arg0, %c0_i32, %arg1 : i32, i32, i32
  }
}

</mosaic_0001>

<llo_original>
// kernel: tpu_custom_call.1
$region0: #{tpu_custom_call.1}
  #allocation0 [shape = 'u32[]', space=smem, size = 0x4, offset = 0x4, fixed_abs, tag = 'smem constant byte address 0x4 - core index']
  #allocation1 [shape = 'u32[72,128]{1,0:T(1,128)}', space=vmem, size = 0x9000, scoped, tag = 'internal scratch']
  %s0 = inlined_call_operand.hbm [shape: f32[2,4,256], index: 0, kind: input, shape index: {}]
  %s1 = inlined_call_operand.hbm [shape: f32[2,4,256], index: 1, kind: output, shape index: {}]
  %s2 = sld [smem:[#allocation0]]
  $region18: #{tpu_custom_call.1} parent=0
    _
  %s4 = ssub.s32 1, %s2
  %s5 = scalar_select 0, %s4, %s2
  $region1: #{tpu_custom_call.1} parent=0
    #allocation2 [shape = 'u8[8192]{0}', space=vmem, size = 0x2000, scoped, tag = 'input window, operand 0, single buffered']
    #allocation3 [shape = 's32[1]{0}', space=sflag, size = 0x4, scoped, tag = 'scoped memory for tpu_custom_call.1']
    #allocation4 [shape = 's32[1]{0}', space=sflag, size = 0x4, scoped, tag = 'scoped memory for tpu_custom_call.1']
    #allocation5 [shape = 'u8[8192]{0}', space=vmem, size = 0x2000, scoped, tag = 'output window, operand 0, single buffered']
    %6 = vsyncpa [#allocation3], 0
    %7 = vsyncpa [#allocation4], 0
    // Predicated region
    $region2: #{tpu_custom_call.1} parent=1 // pred_check
      _
    $region3: #{tpu_custom_call.1} parent=1 // pred_check_branch
      %9 = sbr.rel (0) target = $region5
    $region4: #{tpu_custom_call.1} parent=1 // pred_region
      %11 = vsyncadd [#allocation3], 0
      %s12 = sshll.u32 %s0, 4
      %s13 = int_to_ptr.hbm [resolvable:$true] %s12
      %s14 = sshll.u32 [#allocation2], 4
      %s15 = int_to_ptr.vmem [resolvable:$true] %s14
      %20 = dma.hbm_to_vmem [thread:$0]  %s13, 256, %s15, [#allocation3], 128, 128, 8
    $region5: #{tpu_custom_call.1} parent=1 // pred_fallthru
      _
    // Predicated region
    $region6: #{tpu_custom_call.1} parent=1 // pred_check
      _
    $region7: #{tpu_custom_call.1} parent=1 // pred_check_branch
      %22 = sbr.rel (0) target = $region9
    $region8: #{tpu_custom_call.1} parent=1 // pred_region
      %24 = dma.done [#allocation3], 256
    $region9: #{tpu_custom_call.1} parent=1 // pred_fallthru
      _
    %v25 = vld [vmem:[#allocation2] sm:$0xff]
    %v26 = vld [vmem:[#allocation2 + $0x8] sm:$0xff]
    %v27 = vmul.f32 %v25, %v25
    %v28 = vmul.f32 %v26, %v26
    %31 = vst [vmem:[#allocation1] ss:$2 sm:$0xff] %v27
    %v32 = vld.sshfl [vmem:[#allocation1] sm:$0xff pattern:$0x75316420]
    %v33 = vld.sshfl [vmem:[#allocation1 + $0x8] sm:$0xff pattern:$0x75316420]
    %s34 = scalar_lea.vmem [#allocation1], 16
    %35 = vst [vmem:[%s34] ss:$2 sm:$0xff] %v28
    %v36 = vld.sshfl [vmem:[#allocation1 + $0x10] sm:$0xff pattern:$0x75316420]
    %v37 = vld.sshfl [vmem:[#allocation1 + $0x18] sm:$0xff pattern:$0x75316420]
    %vm42 = vcmask 1043456
    %v43 = vsel %vm42, %v32, 0.0
    %v44 = vrot.slane %v43, 4
    %v45 = vadd.f32 %v43, %v44
    %v46 = vrot.slane %v45, 2
    %v47 = vadd.f32 %v45, %v46
    %v48 = vrot.slane %v47, 1
    %v49 = vadd.f32 %v47, %v48
    %v50 = vsel %vm42, %v33, 0.0
    %v51 = vrot.slane %v50, 4
    %v52 = vadd.f32 %v50, %v51
    %v53 = vrot.slane %v52, 2
    %v54 = vadd.f32 %v52, %v53
    %v55 = vrot.slane %v54, 1
    %v56 = vadd.f32 %v54, %v55
    %v57 = vsel %vm42, %v36, 0.0
    %v58 = vrot.slane %v57, 4
    %v59 = vadd.f32 %v57, %v58
    %v60 = vrot.slane %v59, 2
    %v61 = vadd.f32 %v59, %v60
    %v62 = vrot.slane %v61, 1
    %v63 = vadd.f32 %v61, %v62
    %v64 = vsel %vm42, %v37, 0.0
    %v65 = vrot.slane %v64, 4
    %v66 = vadd.f32 %v64, %v65
    %v67 = vrot.slane %v66, 2
    %v68 = vadd.f32 %v66, %v67
    %v69 = vrot.slane %v68, 1
    %v70 = vadd.f32 %v68, %v69
    %v71 = vrcp.pop 4.0
    %v72 = vmul.f32 4.0, %v71
    %v73 = vsub.f32 1.0, %v72
    %v74 = vmul.f32 %v71, %v73
    %v75 = vadd.f32 %v71, %v74
    %vm76 = vweird.f32 %v71
    %v77 = vsel %vm76, %v71, %v75
    %v78 = vmul.f32 %v49, %v77
    %v79 = vmul.f32 %v56, %v77
    %v80 = vmul.f32 %v63, %v77
    %v81 = vmul.f32 %v70, %v77
    %v82 = vadd.f32 %v78, 1e-08
    %v83 = vadd.f32 %v79, 1e-08
    %v84 = vadd.f32 %v80, 1e-08
    %v85 = vadd.f32 %v81, 1e-08
    %v86 = vrsqrt.pop %v82
    %v87 = vmul.f32 %v86, %v82
    %v88 = vmul.f32 %v87, %v86
    %v89 = vmul.f32 0.5, %v88
    %v90 = vsub.f32 1.5, %v89
    %v91 = vmul.f32 %v86, %v90
    %vm92 = vweird.f32 %v82
    %vm93 = vweird.f32 %v86
    %vm94 = vmor %vm92, %vm93
    %v95 = vsel %vm94, %v86, %v91
    %v96 = vrsqrt.pop %v83
    %v97 = vmul.f32 %v96, %v83
    %v98 = vmul.f32 %v97, %v96
    %v99 = vmul.f32 0.5, %v98
    %v100 = vsub.f32 1.5, %v99
    %v101 = vmul.f32 %v96, %v100
    %vm102 = vweird.f32 %v83
    %vm103 = vweird.f32 %v96
    %vm104 = vmor %vm102, %vm103
    %v105 = vsel %vm104, %v96, %v101
    %v106 = vrsqrt.pop %v84
    %v107 = vmul.f32 %v106, %v84
    %v108 = vmul.f32 %v107, %v106
    %v109 = vmul.f32 0.5, %v108
    %v110 = vsub.f32 1.5, %v109
    %v111 = vmul.f32 %v106, %v110
    %vm112 = vweird.f32 %v84
    %vm113 = vweird.f32 %v106
    %vm114 = vmor %vm112, %vm113
    %v115 = vsel %vm114, %v106, %v111
    %v116 = vrsqrt.pop %v85
    %v117 = vmul.f32 %v116, %v85
    %v118 = vmul.f32 %v117, %v116
    %v119 = vmul.f32 0.5, %v118
    %v120 = vsub.f32 1.5, %v119
    %v121 = vmul.f32 %v116, %v120
    %vm122 = vweird.f32 %v85
    %vm123 = vweird.f32 %v116
    %vm124 = vmor %vm122, %vm123
    %v125 = vsel %vm124, %v116, %v121
    %v130 = vrot.slane %v105, 4
    %v131 = vrot.slane %v125, 4
    %v132 = vsel %vm42, %v95, %v130
    %v133 = vsel %vm42, %v115, %v131
    %v136 = vmul.f32 %v25, %v132
    %v137 = vmul.f32 %v26, %v133
    %138 = vst [vmem:[#allocation5] sm:$0xff] %v136
    %139 = vst [vmem:[#allocation5 + $0x8] sm:$0xff] %v137
    // Predicated region
    $region10: #{tpu_custom_call.1} parent=1 // pred_check
      _
    $region11: #{tpu_custom_call.1} parent=1 // pred_check_branch
      %141 = sbr.rel (0) target = $region13
    $region12: #{tpu_custom_call.1} parent=1 // pred_region
      %143 = vsyncadd [#allocation4], 0
      %s144 = sshll.u32 [#allocation5], 4
      %s145 = int_to_ptr.vmem [resolvable:$true] %s144
      %s146 = sshll.u32 %s1, 4
      %s147 = int_to_ptr.hbm [resolvable:$true] %s146
      %152 = dma.vmem_to_hbm [thread:$0]  %s145, 256, %s147, [#allocation4], 128, 128, 8
    $region13: #{tpu_custom_call.1} parent=1 // pred_fallthru
      _
    // Predicated region
    $region14: #{tpu_custom_call.1} parent=1 // pred_check
      _
    $region15: #{tpu_custom_call.1} parent=1 // pred_check_branch
      %154 = sbr.rel (0) target = $region17
    $region16: #{tpu_custom_call.1} parent=1 // pred_region
      %156 = dma.done [#allocation4], 256
    $region17: #{tpu_custom_call.1} parent=1 // pred_fallthru
      _
    %157 = vsyncpa [#allocation3], 1
    %158 = vsyncpa [#allocation4], 1

</llo_original>
